<compile_context>
chip_gen: v7x
topology: tpu7x:2x2x1
jax: 0.10.0
libtpu: 0.0.40
codegen_flags: <defaults>
</compile_context>

<pallas_src>
import functools

import jax
import jax.numpy as jnp
from jax import lax
from jax.experimental import pallas as pl
from jax.experimental.pallas import tpu as pltpu

IN_DIM = 322
H1 = 64
H2 = 64
H3 = 32
OUT_DIM = 1


def mlp_kernel(x_ref,
               w1_ref, b1_ref,
               w2_ref, b2_ref,
               w3_ref, b3_ref,
               w4_ref, b4_ref,
               o_ref):
    """Fused 4-layer MLP forward for one (block_b, 322) batch tile.

    Internal orientation is features-on-sublanes / batch-on-lanes: every
    intermediate is (H, block_b) with block_b (a multiple of 128) on lanes,
    so bias+ReLU touch full vregs and the final 1-wide head falls out
    lane-dense. All matmuls accumulate in f32 on the MXU.
    """
    # In-kernel bf16 cast: keeps HBM traffic to a single pass over x in its
    # producer dtype (f32 here); no separate XLA convert materialization.
    x = x_ref[...].astype(jnp.bfloat16)                       # (bb, 322)

    # Layer 1: (64, 322) contracted with (bb, 322) along 322 -> (64, bb).
    h = lax.dot_general(w1_ref[...], x,
                        dimension_numbers=(((1,), (1,)), ((), ())),
                        preferred_element_type=jnp.float32)
    h = jnp.maximum(h + b1_ref[...], 0.0)                     # (64, bb) f32

    # Layer 2: (64, 64) @ (64, bb) -> (64, bb).
    h = jnp.dot(w2_ref[...], h.astype(jnp.bfloat16),
                preferred_element_type=jnp.float32)
    h = jnp.maximum(h + b2_ref[...], 0.0)                     # (64, bb) f32

    # Layer 3: (32, 64) @ (64, bb) -> (32, bb).
    h = jnp.dot(w3_ref[...], h.astype(jnp.bfloat16),
                preferred_element_type=jnp.float32)
    h = jnp.maximum(h + b3_ref[...], 0.0)                     # (32, bb) f32

    # Head: (1, 32) @ (32, bb) -> (1, bb); full-width lane-dense store.
    out = jnp.dot(w4_ref[...], h.astype(jnp.bfloat16),
                  preferred_element_type=jnp.float32)
    o_ref[...] = (out + b4_ref[...]).astype(o_ref.dtype)      # (1, bb)


@functools.partial(jax.jit, static_argnames=("block_b",))
def mlp_forward(x, params, *, block_b=None):
    """x: (B, 322) float32 (or bfloat16); params in PyTorch (out, in) layout.

    Returns (B, 1) float32.
    """
    B = x.shape[0]
    assert x.shape[1] == IN_DIM

    if block_b is None:
        # Large tiles amortize the ~0.35 µs fixed per-grid-step overhead, but
        # keep >= 2 grid steps when B >= 256 so both v7x TensorCores get work.
        # Cap at 2048: x f32 tile ~2.6 MB x 2 buffers + <2 MB of f32
        # intermediates fits v5e's 16 MiB default scoped VMEM.
        block_b = min(2048, max(128, 128 * ((B + 255) // 256)))
    assert block_b % 128 == 0, "block_b must be a multiple of 128 (lane width)"
    num_tiles = pl.cdiv(B, block_b)

    def rep(shape):
        # Weights/biases: full-array blocks with constant index_map -> DMA'd
        # once and VMEM-resident across all batch tiles.
        return pl.BlockSpec(shape, lambda i: (0, 0))

    in_specs = [
        # Streaming batch tile in its HBM dtype; no wrapper pad — Pallas pads
        # the ragged last tile on load and masks the ragged output stores.
        pl.BlockSpec((block_b, IN_DIM), lambda i: (i, 0)),
        rep((H1, IN_DIM)), rep((H1, 1)),
        rep((H2, H1)), rep((H2, 1)),
        rep((H3, H2)), rep((H3, 1)),
        rep((OUT_DIM, H3)), rep((OUT_DIM, 1)),
    ]
    # Lane-dense output: (1, B) with batch along lanes, one (1, block_b)
    # stripe per grid step.
    out_spec = pl.BlockSpec((1, block_b), lambda i: (0, i))

    out = pl.pallas_call(
        mlp_kernel,
        out_shape=jax.ShapeDtypeStruct((1, B), jnp.float32),
        grid_spec=pltpu.PrefetchScalarGridSpec(
            num_scalar_prefetch=0,
            grid=(num_tiles,),
            in_specs=in_specs,
            out_specs=out_spec,
        ),
        compiler_params=pltpu.CompilerParams(
            dimension_semantics=("parallel",)),
    )(x,
      params["w1"].astype(jnp.bfloat16), params["b1"],
      params["w2"].astype(jnp.bfloat16), params["b2"],
      params["w3"].astype(jnp.bfloat16), params["b3"],
      params["w4"].astype(jnp.bfloat16), params["b4"])

    # TODO(synk): optional v7x-only fp8 quantization of x/weights (per-tile
    # scales) would halve the dominant HBM read; needs accuracy validation.

    # (1, B) -> (B, 1)
    return out.reshape(B, 1)


def init_params(key):
    """Deterministic synthetic parameters in PyTorch (out, in) layout.

    Biases are stored as (out, 1) columns so they broadcast along the lane
    (batch) axis inside the kernel.
    """
    ks = jax.random.split(key, 8)

    def linear(kw, kb, fan_in, fan_out):
        bound = 1.0 / jnp.sqrt(fan_in)
        w = jax.random.uniform(kw, (fan_out, fan_in), jnp.float32, -bound, bound)
        b = jax.random.uniform(kb, (fan_out, 1), jnp.float32, -bound, bound)
        return w, b

    w1, b1 = linear(ks[0], ks[1], IN_DIM, H1)
    w2, b2 = linear(ks[2], ks[3], H1, H2)
    w3, b3 = linear(ks[4], ks[5], H2, H3)
    w4, b4 = linear(ks[6], ks[7], H3, OUT_DIM)
    return {"w1": w1, "b1": b1, "w2": w2, "b2": b2,
            "w3": w3, "b3": b3, "w4": w4, "b4": b4}


def mlp_reference(x, p):
    """Pure-JAX f32 reference matching the PyTorch forward."""
    h = jnp.maximum(x @ p["w1"].T + p["b1"].T, 0.0)
    h = jnp.maximum(h @ p["w2"].T + p["b2"].T, 0.0)
    h = jnp.maximum(h @ p["w3"].T + p["b3"].T, 0.0)
    return h @ p["w4"].T + p["b4"].T


if __name__ == "__main__":
    key = jax.random.PRNGKey(0)
    k_x, k_p = jax.random.split(key)

    # Small demo batch: 256 rows -> auto block_b=128 -> grid of 2 (keeps both
    # v7x TensorCores busy). Production batches auto-pick up to 2048 rows.
    B = 256
    x = jax.random.normal(k_x, (B, IN_DIM), jnp.float32)
    params = init_params(k_p)

    out = mlp_forward(x, params)
    out = jax.block_until_ready(out)

    ref = mlp_reference(x, params)
    assert out.shape == (B, OUT_DIM)
    # bf16 inputs/weights with f32 accumulation -> relaxed tolerance vs f32 ref.
    assert jnp.allclose(out, ref, atol=2e-2, rtol=2e-2), \
        float(jnp.max(jnp.abs(out - ref)))

    print("KERNEL_OK")
</pallas_src>

<mosaic_0001>
module attributes {stable_mosaic.version = 11 : i64} {
  func.func @mlp_kernel(%arg0: i32, %arg1: memref<128x322xf32, #tpu.memory_space<vmem>>, %arg2: memref<64x322xbf16, #tpu.memory_space<vmem>>, %arg3: memref<64x1xf32, #tpu.memory_space<vmem>>, %arg4: memref<64x64xbf16, #tpu.memory_space<vmem>>, %arg5: memref<64x1xf32, #tpu.memory_space<vmem>>, %arg6: memref<32x64xbf16, #tpu.memory_space<vmem>>, %arg7: memref<32x1xf32, #tpu.memory_space<vmem>>, %arg8: memref<1x32xbf16, #tpu.memory_space<vmem>>, %arg9: memref<1x1xf32, #tpu.memory_space<vmem>>, %arg10: memref<1x128xf32, #tpu.memory_space<vmem>>) attributes {dimension_semantics = [#tpu.dimension_semantics<parallel>], iteration_bounds = array<i64: 2>, scalar_prefetch = 0 : i64, scratch_operands = 0 : i64, tpu.core_type = #tpu.core_type<tc>, window_params = [{transform_indices = @transform_0, window_bounds = array<i64: 128, 322>}, {pipeline_mode = #tpu.pipeline_mode<synchronous>, transform_indices = @transform_1, window_bounds = array<i64: 64, 322>}, {pipeline_mode = #tpu.pipeline_mode<synchronous>, transform_indices = @transform_2, window_bounds = array<i64: 64, 1>}, {pipeline_mode = #tpu.pipeline_mode<synchronous>, transform_indices = @transform_3, window_bounds = array<i64: 64, 64>}, {pipeline_mode = #tpu.pipeline_mode<synchronous>, transform_indices = @transform_4, window_bounds = array<i64: 64, 1>}, {pipeline_mode = #tpu.pipeline_mode<synchronous>, transform_indices = @transform_5, window_bounds = array<i64: 32, 64>}, {pipeline_mode = #tpu.pipeline_mode<synchronous>, transform_indices = @transform_6, window_bounds = array<i64: 32, 1>}, {pipeline_mode = #tpu.pipeline_mode<synchronous>, transform_indices = @transform_7, window_bounds = array<i64: 1, 32>}, {pipeline_mode = #tpu.pipeline_mode<synchronous>, transform_indices = @transform_8, window_bounds = array<i64: 1, 1>}, {transform_indices = @transform_9, window_bounds = array<i64: 1, 128>}]} {
    %c0 = arith.constant 0 : index
    %c0_0 = arith.constant 0 : index
    %0 = vector.load %arg1[%c0, %c0_0] : memref<128x322xf32, #tpu.memory_space<vmem>>, vector<128x322xf32>
    %1 = arith.truncf %0 : vector<128x322xf32> to vector<128x322xbf16>
    %c0_1 = arith.constant 0 : index
    %c0_2 = arith.constant 0 : index
    %2 = vector.load %arg2[%c0_1, %c0_2] : memref<64x322xbf16, #tpu.memory_space<vmem>>, vector<64x322xbf16>
    %cst = arith.constant dense<0.000000e+00> : vector<64x128xf32>
    %3 = tpu.matmul %2, %1, %cst {dimension_numbers = #tpu.dot_dimension_numbers<[1], [1], [0], [0], [0, 0, 1, 0], [], []>} : vector<64x322xbf16>, vector<128x322xbf16>, vector<64x128xf32> -> vector<64x128xf32>
    %c0_3 = arith.constant 0 : index
    %c0_4 = arith.constant 0 : index
    %4 = vector.load %arg3[%c0_3, %c0_4] : memref<64x1xf32, #tpu.memory_space<vmem>>, vector<64x1xf32>
    %5 = vector.broadcast %4 : vector<64x1xf32> to vector<64x128xf32>
    %6 = arith.addf %3, %5 : vector<64x128xf32>
    %cst_5 = arith.constant 0.000000e+00 : f32
    %7 = vector.broadcast %cst_5 : f32 to vector<64x128xf32>
    %8 = arith.maximumf %6, %7 : vector<64x128xf32>
    %c0_6 = arith.constant 0 : index
    %c0_7 = arith.constant 0 : index
    %9 = vector.load %arg4[%c0_6, %c0_7] : memref<64x64xbf16, #tpu.memory_space<vmem>>, vector<64x64xbf16>
    %10 = arith.truncf %8 : vector<64x128xf32> to vector<64x128xbf16>
    %cst_8 = arith.constant dense<0.000000e+00> : vector<64x128xf32>
    %11 = tpu.matmul %9, %10, %cst_8 {dimension_numbers = #tpu.dot_dimension_numbers<[1], [0], [0], [1], [0, 0, 1, 1], [], []>} : vector<64x64xbf16>, vector<64x128xbf16>, vector<64x128xf32> -> vector<64x128xf32>
    %c0_9 = arith.constant 0 : index
    %c0_10 = arith.constant 0 : index
    %12 = vector.load %arg5[%c0_9, %c0_10] : memref<64x1xf32, #tpu.memory_space<vmem>>, vector<64x1xf32>
    %13 = vector.broadcast %12 : vector<64x1xf32> to vector<64x128xf32>
    %14 = arith.addf %11, %13 : vector<64x128xf32>
    %cst_11 = arith.constant 0.000000e+00 : f32
    %15 = vector.broadcast %cst_11 : f32 to vector<64x128xf32>
    %16 = arith.maximumf %14, %15 : vector<64x128xf32>
    %c0_12 = arith.constant 0 : index
    %c0_13 = arith.constant 0 : index
    %17 = vector.load %arg6[%c0_12, %c0_13] : memref<32x64xbf16, #tpu.memory_space<vmem>>, vector<32x64xbf16>
    %18 = arith.truncf %16 : vector<64x128xf32> to vector<64x128xbf16>
    %cst_14 = arith.constant dense<0.000000e+00> : vector<32x128xf32>
    %19 = tpu.matmul %17, %18, %cst_14 {dimension_numbers = #tpu.dot_dimension_numbers<[1], [0], [0], [1], [0, 0, 1, 1], [], []>} : vector<32x64xbf16>, vector<64x128xbf16>, vector<32x128xf32> -> vector<32x128xf32>
    %c0_15 = arith.constant 0 : index
    %c0_16 = arith.constant 0 : index
    %20 = vector.load %arg7[%c0_15, %c0_16] : memref<32x1xf32, #tpu.memory_space<vmem>>, vector<32x1xf32>
    %21 = vector.broadcast %20 : vector<32x1xf32> to vector<32x128xf32>
    %22 = arith.addf %19, %21 : vector<32x128xf32>
    %cst_17 = arith.constant 0.000000e+00 : f32
    %23 = vector.broadcast %cst_17 : f32 to vector<32x128xf32>
    %24 = arith.maximumf %22, %23 : vector<32x128xf32>
    %c0_18 = arith.constant 0 : index
    %c0_19 = arith.constant 0 : index
    %25 = vector.load %arg8[%c0_18, %c0_19] : memref<1x32xbf16, #tpu.memory_space<vmem>>, vector<1x32xbf16>
    %26 = arith.truncf %24 : vector<32x128xf32> to vector<32x128xbf16>
    %cst_20 = arith.constant dense<0.000000e+00> : vector<1x128xf32>
    %27 = tpu.matmul %25, %26, %cst_20 {dimension_numbers = #tpu.dot_dimension_numbers<[1], [0], [0], [1], [0, 0, 1, 1], [], []>} : vector<1x32xbf16>, vector<32x128xbf16>, vector<1x128xf32> -> vector<1x128xf32>
    %c0_21 = arith.constant 0 : index
    %c0_22 = arith.constant 0 : index
    %28 = vector.load %arg9[%c0_21, %c0_22] : memref<1x1xf32, #tpu.memory_space<vmem>>, vector<1x1xf32>
    %29 = vector.broadcast %28 : vector<1x1xf32> to vector<1x128xf32>
    %30 = arith.addf %27, %29 : vector<1x128xf32>
    %c0_23 = arith.constant 0 : index
    %c0_24 = arith.constant 0 : index
    %31 = vector.load %arg10[%c0_23, %c0_24] : memref<1x128xf32, #tpu.memory_space<vmem>>, vector<1x128xf32>
    tpu.vector_store %arg10[%c0_23, %c0_24], %30 {strides = array<i32>} : memref<1x128xf32, #tpu.memory_space<vmem>>, vector<1x128xf32>,
    return
  }
  func.func @transform_0(%arg0: i32) -> (i32, i32) {
    %c0_i32 = arith.constant 0 : i32
    %c0_i32_0 = arith.constant 0 : i32
    return %arg0, %c0_i32 : i32, i32
  }
  func.func @transform_1(%arg0: i32) -> (i32, i32) {
    %c0_i32 = arith.constant 0 : i32
    %c0_i32_0 = arith.constant 0 : i32
    %c0_i32_1 = arith.constant 0 : i32
    return %c0_i32, %c0_i32_0 : i32, i32
  }
  func.func @transform_2(%arg0: i32) -> (i32, i32) {
    %c0_i32 = arith.constant 0 : i32
    %c0_i32_0 = arith.constant 0 : i32
    %c0_i32_1 = arith.constant 0 : i32
    return %c0_i32, %c0_i32_0 : i32, i32
  }
  func.func @transform_3(%arg0: i32) -> (i32, i32) {
    %c0_i32 = arith.constant 0 : i32
    %c0_i32_0 = arith.constant 0 : i32
    %c0_i32_1 = arith.constant 0 : i32
    return %c0_i32, %c0_i32_0 : i32, i32
  }
  func.func @transform_4(%arg0: i32) -> (i32, i32) {
    %c0_i32 = arith.constant 0 : i32
    %c0_i32_0 = arith.constant 0 : i32
    %c0_i32_1 = arith.constant 0 : i32
    return %c0_i32, %c0_i32_0 : i32, i32
  }
  func.func @transform_5(%arg0: i32) -> (i32, i32) {
    %c0_i32 = arith.constant 0 : i32
    %c0_i32_0 = arith.constant 0 : i32
    %c0_i32_1 = arith.constant 0 : i32
    return %c0_i32, %c0_i32_0 : i32, i32
  }
  func.func @transform_6(%arg0: i32) -> (i32, i32) {
    %c0_i32 = arith.constant 0 : i32
    %c0_i32_0 = arith.constant 0 : i32
    %c0_i32_1 = arith.constant 0 : i32
    return %c0_i32, %c0_i32_0 : i32, i32
  }
  func.func @transform_7(%arg0: i32) -> (i32, i32) {
    %c0_i32 = arith.constant 0 : i32
    %c0_i32_0 = arith.constant 0 : i32
    %c0_i32_1 = arith.constant 0 : i32
    return %c0_i32, %c0_i32_0 : i32, i32
  }
  func.func @transform_8(%arg0: i32) -> (i32, i32) {
    %c0_i32 = arith.constant 0 : i32
    %c0_i32_0 = arith.constant 0 : i32
    %c0_i32_1 = arith.constant 0 : i32
    return %c0_i32, %c0_i32_0 : i32, i32
  }
  func.func @transform_9(%arg0: i32) -> (i32, i32) {
    %c0_i32 = arith.constant 0 : i32
    %c0_i32_0 = arith.constant 0 : i32
    return %c0_i32, %arg0 : i32, i32
  }
}

</mosaic_0001>

<llo_original>
// kernel: mlp_forward.1
$region0: #{mlp_forward.1}
  #allocation0 [shape = 'u32[]', space=smem, size = 0x4, offset = 0x4, fixed_abs, tag = 'smem constant byte address 0x4 - core index']
  #allocation1 [shape = 'u32[144,128]{1,0:T(1,128)}', space=vmem, size = 0x12000, scoped, tag = 'internal scratch']
  #allocation2 [shape = 'f32[1,1]{1,0:T(1,128)S(1)}', space=vmem, size = 0x200, scoped, tag = 'scoped memory for mlp_forward.1']
  %s0 = inlined_call_operand.vmem [shape: f32[256,322], index: 0, kind: input, shape index: {}]
  %s1 = inlined_call_operand.vmem [shape: bf16[64,322], index: 1, kind: input, shape index: {}]
  %s2 = inlined_call_operand.vmem [shape: f32[64,1], index: 2, kind: input, shape index: {}]
  %s3 = inlined_call_operand.vmem [shape: bf16[64,64], index: 3, kind: input, shape index: {}]
  %s4 = inlined_call_operand.vmem [shape: f32[64,1], index: 4, kind: input, shape index: {}]
  %s5 = inlined_call_operand.vmem [shape: bf16[32,64], index: 5, kind: input, shape index: {}]
  %s6 = inlined_call_operand.vmem [shape: f32[32,1], index: 6, kind: input, shape index: {}]
  %s7 = inlined_call_operand.vmem [shape: bf16[1,32], index: 7, kind: input, shape index: {}]
  %s8 = inlined_call_operand.<no memory space> [shape: f32[1,1], index: 8, kind: input, shape index: {}]
  %s9 = inlined_call_operand.hbm [shape: f32[1,256], index: 9, kind: output, shape index: {}]
  %s10 = sld [smem:[#allocation0]]
  $region69: #{mlp_forward.1} parent=0
    _
  %s12 = ssub.s32 1, %s10
  %s13 = scalar_select 0, %s12, %s10
  %v14 = vstv %s8
  %15 = vst [vmem:[#allocation2] sm:$0x1] %v14
  $region1: #{mlp_forward.1} parent=0
    #allocation3 [shape = 'u8[1024]{0}', space=vmem, size = 0x400, scoped, tag = 'output window, operand 0']
    #allocation4 [shape = 's32[2]{0}', space=sflag, size = 0x8, scoped, tag = 'scoped memory for mlp_forward.1']
    %16 = vsyncpa [#allocation4], 0
    %s17 = scalar_lea.sflag [#allocation4], 1
    %18 = vsyncpa %s17, 0
    loop: start=0, step=1, limit=4
    $region2: #{mlp_forward.1} parent=1 // loop_pre_header
      _
    $region3: #{mlp_forward.1} parent=1 // loop_header
      %s20 = sphi 0, %s24
      %p21 = scmp.ge.s32.totalorder %s20, 4
      %s30 = sphi 0, %s32
      %s33 = sphi 0, %s30
      %s34 = sphi 0, %s33
      %s50 = sphi 0, %s34
      %s54 = sphi 0, %s54
      %s56 = sphi 0, %s54
      %s57 = sphi 0, %s56
      %s71 = sphi 0, %s57
      %s75 = sphi 0, %s75
      %s77 = sphi 0, %s75
      %s78 = sphi 0, %s77
      %s92 = sphi 0, %s78
      %s96 = sphi 0, %s96
      %s98 = sphi 0, %s96
      %s99 = sphi 0, %s98
      %s113 = sphi 0, %s99
      %s117 = sphi 0, %s117
      %s119 = sphi 0, %s117
      %s120 = sphi 0, %s119
      %s134 = sphi 0, %s120
      %s138 = sphi 0, %s138
      %s140 = sphi 0, %s138
      %s141 = sphi 0, %s140
      %s155 = sphi 0, %s141
      %s159 = sphi 0, %s159
      %s161 = sphi 0, %s159
      %s162 = sphi 0, %s161
      %s176 = sphi 0, %s162
      %s180 = sphi 0, %s180
      %s182 = sphi 0, %s180
      %s183 = sphi 0, %s182
      %s197 = sphi 0, %s183
      %s201 = sphi 0, %s201
      %s203 = sphi 0, %s201
      %s204 = sphi 0, %s203
      %s218 = sphi 0, %s204
      %s224 = sphi 0, %s226
      %s227 = sphi 0, %s224
      %s228 = sphi 0, %s227
      %s244 = sphi 0, %s228
    $region4: #{mlp_forward.1} parent=1 // loop_header_branch
      %23 = sbr.rel (%p21) target = $region8
    $region5: #{mlp_forward.1} parent=1 // loop_body
      %s25 = ssub.s32 %s20, 1
      %s26 = ssub.s32 %s20, 2
      %s27 = sadd.s32 %s20, 1
      %s28 = ssub.s32 %s20, %s27
      %p29 = scmp.eq.s32.totalorder %s28, 0
      %s31 = sadd.s32 %s30, 1
      %s32 = scalar_select %p29, %s30, %s31
      %p35 = pneg %p29
      %p36 = scmp.eq.s32.totalorder %s20, 1
      %p37 = por %p35, %p36
      %p38 = scmp.ne.s32.totalorder %s30, %s33
      %p39 = scmp.eq.s32.totalorder %s20, 0
      %p40 = por %p38, %p39
      %p41 = scmp.ne.s32.totalorder %s30, %s33
      %p42 = scmp.eq.s32.totalorder %s25, 1
      %p43 = por %p41, %p42
      %p44 = scmp.ne.s32.totalorder %s33, %s34
      %p45 = scmp.eq.s32.totalorder %s25, 0
      %p46 = por %p44, %p45
      %p47 = scmp.ne.s32.totalorder %s33, %s34
      %p48 = scmp.eq.s32.totalorder %s26, 1
      %p49 = por %p47, %p48
      %p51 = scmp.ne.s32.totalorder %s34, %s50
      %p52 = scmp.eq.s32.totalorder %s26, 0
      %p53 = por %p51, %p52
      %s55 = sadd.s32 %s54, 1
      %p58 = scmp.eq.s32.totalorder %s20, 1
      %p59 = scmp.ne.s32.totalorder %s54, %s56
      %p60 = scmp.eq.s32.totalorder %s20, 0
      %p61 = por %p59, %p60
      %p62 = scmp.ne.s32.totalorder %s54, %s56
      %p63 = scmp.eq.s32.totalorder %s25, 1
      %p64 = por %p62, %p63
      %p65 = scmp.ne.s32.totalorder %s56, %s57
      %p66 = scmp.eq.s32.totalorder %s25, 0
      %p67 = por %p65, %p66
      %p68 = scmp.ne.s32.totalorder %s56, %s57
      %p69 = scmp.eq.s32.totalorder %s26, 1
      %p70 = por %p68, %p69
      %p72 = scmp.ne.s32.totalorder %s57, %s71
      %p73 = scmp.eq.s32.totalorder %s26, 0
      %p74 = por %p72, %p73
      %s76 = sadd.s32 %s75, 1
      %p79 = scmp.eq.s32.totalorder %s20, 1
      %p80 = scmp.ne.s32.totalorder %s75, %s77
      %p81 = scmp.eq.s32.totalorder %s20, 0
      %p82 = por %p80, %p81
      %p83 = scmp.ne.s32.totalorder %s75, %s77
      %p84 = scmp.eq.s32.totalorder %s25, 1
      %p85 = por %p83, %p84
      %p86 = scmp.ne.s32.totalorder %s77, %s78
      %p87 = scmp.eq.s32.totalorder %s25, 0
      %p88 = por %p86, %p87
      %p89 = scmp.ne.s32.totalorder %s77, %s78
      %p90 = scmp.eq.s32.totalorder %s26, 1
      %p91 = por %p89, %p90
      %p93 = scmp.ne.s32.totalorder %s78, %s92
      %p94 = scmp.eq.s32.totalorder %s26, 0
      %p95 = por %p93, %p94
      %s97 = sadd.s32 %s96, 1
      %p100 = scmp.eq.s32.totalorder %s20, 1
      %p101 = scmp.ne.s32.totalorder %s96, %s98
      %p102 = scmp.eq.s32.totalorder %s20, 0
      %p103 = por %p101, %p102
      %p104 = scmp.ne.s32.totalorder %s96, %s98
      %p105 = scmp.eq.s32.totalorder %s25, 1
      %p106 = por %p104, %p105
      %p107 = scmp.ne.s32.totalorder %s98, %s99
      %p108 = scmp.eq.s32.totalorder %s25, 0
      %p109 = por %p107, %p108
      %p110 = scmp.ne.s32.totalorder %s98, %s99
      %p111 = scmp.eq.s32.totalorder %s26, 1
      %p112 = por %p110, %p111
      %p114 = scmp.ne.s32.totalorder %s99, %s113
      %p115 = scmp.eq.s32.totalorder %s26, 0
      %p116 = por %p114, %p115
      %s118 = sadd.s32 %s117, 1
      %p121 = scmp.eq.s32.totalorder %s20, 1
      %p122 = scmp.ne.s32.totalorder %s117, %s119
      %p123 = scmp.eq.s32.totalorder %s20, 0
      %p124 = por %p122, %p123
      %p125 = scmp.ne.s32.totalorder %s117, %s119
      %p126 = scmp.eq.s32.totalorder %s25, 1
      %p127 = por %p125, %p126
      %p128 = scmp.ne.s32.totalorder %s119, %s120
      %p129 = scmp.eq.s32.totalorder %s25, 0
      %p130 = por %p128, %p129
      %p131 = scmp.ne.s32.totalorder %s119, %s120
      %p132 = scmp.eq.s32.totalorder %s26, 1
      %p133 = por %p131, %p132
      %p135 = scmp.ne.s32.totalorder %s120, %s134
      %p136 = scmp.eq.s32.totalorder %s26, 0
      %p137 = por %p135, %p136
      %s139 = sadd.s32 %s138, 1
      %p142 = scmp.eq.s32.totalorder %s20, 1
      %p143 = scmp.ne.s32.totalorder %s138, %s140
      %p144 = scmp.eq.s32.totalorder %s20, 0
      %p145 = por %p143, %p144
      %p146 = scmp.ne.s32.totalorder %s138, %s140
      %p147 = scmp.eq.s32.totalorder %s25, 1
      %p148 = por %p146, %p147
      %p149 = scmp.ne.s32.totalorder %s140, %s141
      %p150 = scmp.eq.s32.totalorder %s25, 0
      %p151 = por %p149, %p150
      %p152 = scmp.ne.s32.totalorder %s140, %s141
      %p153 = scmp.eq.s32.totalorder %s26, 1
      %p154 = por %p152, %p153
      %p156 = scmp.ne.s32.totalorder %s141, %s155
      %p157 = scmp.eq.s32.totalorder %s26, 0
      %p158 = por %p156, %p157
      %s160 = sadd.s32 %s159, 1
      %p163 = scmp.eq.s32.totalorder %s20, 1
      %p164 = scmp.ne.s32.totalorder %s159, %s161
      %p165 = scmp.eq.s32.totalorder %s20, 0
      %p166 = por %p164, %p165
      %p167 = scmp.ne.s32.totalorder %s159, %s161
      %p168 = scmp.eq.s32.totalorder %s25, 1
      %p169 = por %p167, %p168
      %p170 = scmp.ne.s32.totalorder %s161, %s162
      %p171 = scmp.eq.s32.totalorder %s25, 0
      %p172 = por %p170, %p171
      %p173 = scmp.ne.s32.totalorder %s161, %s162
      %p174 = scmp.eq.s32.totalorder %s26, 1
      %p175 = por %p173, %p174
      %p177 = scmp.ne.s32.totalorder %s162, %s176
      %p178 = scmp.eq.s32.totalorder %s26, 0
      %p179 = por %p177, %p178
      %s181 = sadd.s32 %s180, 1
      %p184 = scmp.eq.s32.totalorder %s20, 1
      %p185 = scmp.ne.s32.totalorder %s180, %s182
      %p186 = scmp.eq.s32.totalorder %s20, 0
      %p187 = por %p185, %p186
      %p188 = scmp.ne.s32.totalorder %s180, %s182
      %p189 = scmp.eq.s32.totalorder %s25, 1
      %p190 = por %p188, %p189
      %p191 = scmp.ne.s32.totalorder %s182, %s183
      %p192 = scmp.eq.s32.totalorder %s25, 0
      %p193 = por %p191, %p192
      %p194 = scmp.ne.s32.totalorder %s182, %s183
      %p195 = scmp.eq.s32.totalorder %s26, 1
      %p196 = por %p194, %p195
      %p198 = scmp.ne.s32.totalorder %s183, %s197
      %p199 = scmp.eq.s32.totalorder %s26, 0
      %p200 = por %p198, %p199
      %s202 = sadd.s32 %s201, 1
      %p205 = scmp.eq.s32.totalorder %s20, 1
      %p206 = scmp.ne.s32.totalorder %s201, %s203
      %p207 = scmp.eq.s32.totalorder %s20, 0
      %p208 = por %p206, %p207
      %p209 = scmp.ne.s32.totalorder %s201, %s203
      %p210 = scmp.eq.s32.totalorder %s25, 1
      %p211 = por %p209, %p210
      %p212 = scmp.ne.s32.totalorder %s203, %s204
      %p213 = scmp.eq.s32.totalorder %s25, 0
      %p214 = por %p212, %p213
      %p215 = scmp.ne.s32.totalorder %s203, %s204
      %p216 = scmp.eq.s32.totalorder %s26, 1
      %p217 = por %p215, %p216
      %p219 = scmp.ne.s32.totalorder %s204, %s218
      %p220 = scmp.eq.s32.totalorder %s26, 0
      %p221 = por %p219, %p220
      %s222 = ssub.s32 %s20, %s27
      %p223 = scmp.eq.s32.totalorder %s222, 0
      %s225 = sadd.s32 %s224, 1
      %s226 = scalar_select %p223, %s224, %s225
      %p229 = pneg %p223
      %p230 = scmp.eq.s32.totalorder %s20, 1
      %p231 = por %p229, %p230
      %p232 = scmp.ne.s32.totalorder %s224, %s227
      %p233 = scmp.eq.s32.totalorder %s20, 0
      %p234 = por %p232, %p233
      %p235 = scmp.ne.s32.totalorder %s224, %s227
      %p236 = scmp.eq.s32.totalorder %s25, 1
      %p237 = por %p235, %p236
      %p238 = scmp.ne.s32.totalorder %s227, %s228
      %p239 = scmp.eq.s32.totalorder %s25, 0
      %p240 = por %p238, %p239
      %p241 = scmp.ne.s32.totalorder %s227, %s228
      %p242 = scmp.eq.s32.totalorder %s26, 1
      %p243 = por %p241, %p242
      %p245 = scmp.ne.s32.totalorder %s228, %s244
      %p246 = scmp.eq.s32.totalorder %s26, 0
      %p247 = por %p245, %p246
      %p248 = scmp.le.s32.totalorder 1, %s20
      %p249 = scmp.lt.s32.totalorder %s20, 3
      %p250 = pnand %p248, %p249
      %p251 = pneg %p250
      // Predicated region
      $region9: #{mlp_forward.1} parent=5 // pred_check
        _
      $region10: #{mlp_forward.1} parent=5 // pred_check_branch
        %253 = sbr.rel (%p250) target = $region12
      $region11: #{mlp_forward.1} parent=5 // pred_region
        %s254 = ssub.s32 %s20, 1
        // Predicated region
        $region13: #{mlp_forward.1} parent=11 // pred_check
          %p255 = pneg %p67
        $region14: #{mlp_forward.1} parent=11 // pred_check_branch
          %257 = sbr.rel (%p255) target = $region16
        $region15: #{mlp_forward.1} parent=11 // pred_region
          _
        $region16: #{mlp_forward.1} parent=11 // pred_fallthru
          _
        // Predicated region
        $region17: #{mlp_forward.1} parent=11 // pred_check
          %p258 = pneg %p88
        $region18: #{mlp_forward.1} parent=11 // pred_check_branch
          %260 = sbr.rel (%p258) target = $region20
        $region19: #{mlp_forward.1} parent=11 // pred_region
          _
        $region20: #{mlp_forward.1} parent=11 // pred_fallthru
          _
        // Predicated region
        $region21: #{mlp_forward.1} parent=11 // pred_check
          %p261 = pneg %p109
        $region22: #{mlp_forward.1} parent=11 // pred_check_branch
          %263 = sbr.rel (%p261) target = $region24
        $region23: #{mlp_forward.1} parent=11 // pred_region
          _
        $region24: #{mlp_forward.1} parent=11 // pred_fallthru
          _
        // Predicated region
        $region25: #{mlp_forward.1} parent=11 // pred_check
          %p264 = pneg %p130
        $region26: #{mlp_forward.1} parent=11 // pred_check_branch
          %266 = sbr.rel (%p264) target = $region28
        $region27: #{mlp_forward.1} parent=11 // pred_region
          _
        $region28: #{mlp_forward.1} parent=11 // pred_fallthru
          _
        // Predicated region
        $region29: #{mlp_forward.1} parent=11 // pred_check
          %p267 = pneg %p151
        $region30: #{mlp_forward.1} parent=11 // pred_check_branch
          %269 = sbr.rel (%p267) target = $region32
        $region31: #{mlp_forward.1} parent=11 // pred_region
          _
        $region32: #{mlp_forward.1} parent=11 // pred_fallthru
          _
        // Predicated region
        $region33: #{mlp_forward.1} parent=11 // pred_check
          %p270 = pneg %p172
        $region34: #{mlp_forward.1} parent=11 // pred_check_branch
          %272 = sbr.rel (%p270) target = $region36
        $region35: #{mlp_forward.1} parent=11 // pred_region
          _
        $region36: #{mlp_forward.1} parent=11 // pred_fallthru
          _
        // Predicated region
        $region37: #{mlp_forward.1} parent=11 // pred_check
          %p273 = pneg %p193
        $region38: #{mlp_forward.1} parent=11 // pred_check_branch
          %275 = sbr.rel (%p273) target = $region40
        $region39: #{mlp_forward.1} parent=11 // pred_region
          _
        $region40: #{mlp_forward.1} parent=11 // pred_fallthru
          _
        // Predicated region
        $region41: #{mlp_forward.1} parent=11 // pred_check
          %p276 = pneg %p214
        $region42: #{mlp_forward.1} parent=11 // pred_check_branch
          %278 = sbr.rel (%p276) target = $region44
        $region43: #{mlp_forward.1} parent=11 // pred_region
          _
        $region44: #{mlp_forward.1} parent=11 // pred_fallthru
          _
      $region12: #{mlp_forward.1} parent=5 // pred_fallthru
        _
      %p279 = scmp.lt.s32.totalorder %s20, 2
      // Predicated region
      $region45: #{mlp_forward.1} parent=5 // pred_check
        %p280 = pneg %p279
      $region46: #{mlp_forward.1} parent=5 // pred_check_branch
        %282 = sbr.rel (%p280) target = $region48
      $region47: #{mlp_forward.1} parent=5 // pred_region
        // Predicated region
        $region49: #{mlp_forward.1} parent=47 // pred_check
          %p283 = pneg %p40
        $region50: #{mlp_forward.1} parent=47 // pred_check_branch
          %285 = sbr.rel (%p283) target = $region52
        $region51: #{mlp_forward.1} parent=47 // pred_region
          %s286 = smul.u32 16, %s20
          %p287 = scmp.lt.s32.totalorder %s286, 31
          %s288 = scalar_select %p287, %s286, 31
          %s289 = smul.addr %s288, 3
          %s290 = smul.addr %s289, 8
          %s291 = scalar_lea.vmem %s0, %s290
          %s292 = smul.u32 16, %s20
        $region52: #{mlp_forward.1} parent=47 // pred_fallthru
          _
      $region48: #{mlp_forward.1} parent=5 // pred_fallthru
        _
      %p293 = scmp.le.s32.totalorder 1, %s20
      %p294 = scmp.lt.s32.totalorder %s20, 3
      %p295 = pnand %p293, %p294
      %p296 = pneg %p295
      // Predicated region
      $region53: #{mlp_forward.1} parent=5 // pred_check
        _
      $region54: #{mlp_forward.1} parent=5 // pred_check_branch
        %298 = sbr.rel (%p295) target = $region56
      $region55: #{mlp_forward.1} parent=5 // pred_region
        %s299 = ssub.s32 %s20, 1
        %s300 = smul.u32 16, %s25
        %p301 = scmp.lt.s32.totalorder %s300, 31
        %s302 = scalar_select %p301, %s300, 31
        %s303 = smul.addr %s302, 3
        %s304 = smul.addr %s303, 8
        %s305 = scalar_lea.vmem %s0, %s304
        %p306 = pneg %p46
        %p307 = pneg %p43
        %p308 = pneg %p67
        %p309 = pneg %p64
        %p310 = pneg %p88
        %p311 = pneg %p85
        %p312 = pneg %p109
        %p313 = pneg %p106
        %p314 = pneg %p130
        %p315 = pneg %p127
        %p316 = pneg %p151
        %p317 = pneg %p148
        %p318 = pneg %p172
        %p319 = pneg %p169
        %p320 = pneg %p193
        %p321 = pneg %p190
        %p322 = pneg %p214
        %p323 = pneg %p211
        %p324 = pneg %p240
        %p325 = pneg %p237
        %s326 = sand.u32 %s227, 1
        %s327 = scalar_lea.sflag [#allocation4], %s326
        %s328 = sand.u32 %s227, 1
        %s329 = scalar_lea.vmem [#allocation3], %s328
        %s330 = smul.u32 16, %s25
        %p331 = scmp.lt.s32.totalorder %s330, 31
        %s332 = scalar_select %p331, %s330, 31
        %s333 = smul.addr %s332, 3
        %s334 = smul.addr %s333, 8
        %s335 = scalar_lea.vmem %s0, %s334
        %s336 = smul.u32 16, %s25
        %v338 = vld [vmem:[%s335] sm:$0xff]
        %v339 = vld [vmem:[%s335 + $0x8] sm:$0xff]
        %v340 = vld [vmem:[%s335 + $0x10] sm:$0xff]
        %v341 = vld [vmem:[%s335 + $0x18] sm:$0xff]
        %v342 = vld [vmem:[%s335 + $0x20] sm:$0xff]
        %v343 = vld [vmem:[%s335 + $0x28] sm:$0xff]
        %v344 = vld [vmem:[%s335 + $0x30] sm:$0xff]
        %v345 = vld [vmem:[%s335 + $0x38] sm:$0xff]
        %v346 = vld [vmem:[%s335 + $0x40] sm:$0xff]
        %v347 = vld [vmem:[%s335 + $0x48] sm:$0xff]
        %v348 = vld [vmem:[%s335 + $0x50] sm:$0xff]
        %v349 = vld [vmem:[%s335 + $0x58] sm:$0xff]
        %v350 = vld [vmem:[%s335 + $0x60] sm:$0xff]
        %v351 = vld [vmem:[%s335 + $0x68] sm:$0xff]
        %v352 = vld [vmem:[%s335 + $0x70] sm:$0xff]
        %v353 = vld [vmem:[%s335 + $0x78] sm:$0xff]
        %v354 = vld [vmem:[%s335 + $0x80] sm:$0xff]
        %v355 = vld [vmem:[%s335 + $0x88] sm:$0xff]
        %v356 = vld [vmem:[%s335 + $0x90] sm:$0xff]
        %v357 = vld [vmem:[%s335 + $0x98] sm:$0xff]
        %v358 = vld [vmem:[%s335 + $0xa0] sm:$0xff]
        %v359 = vld [vmem:[%s335 + $0xa8] sm:$0xff]
        %v360 = vld [vmem:[%s335 + $0xb0] sm:$0xff]
        %v361 = vld [vmem:[%s335 + $0xb8] sm:$0xff]
        %v362 = vld [vmem:[%s335 + $0xc0] sm:$0xff]
        %v363 = vld [vmem:[%s335 + $0xc8] sm:$0xff]
        %v364 = vld [vmem:[%s335 + $0xd0] sm:$0xff]
        %v365 = vld [vmem:[%s335 + $0xd8] sm:$0xff]
        %v366 = vld [vmem:[%s335 + $0xe0] sm:$0xff]
        %v367 = vld [vmem:[%s335 + $0xe8] sm:$0xff]
        %v368 = vld [vmem:[%s335 + $0xf0] sm:$0xff]
        %v369 = vld [vmem:[%s335 + $0xf8] sm:$0xff]
        %v370 = vld [vmem:[%s335 + $0x100] sm:$0xff]
        %v371 = vld [vmem:[%s335 + $0x108] sm:$0xff]
        %v372 = vld [vmem:[%s335 + $0x110] sm:$0xff]
        %v373 = vld [vmem:[%s335 + $0x118] sm:$0xff]
        %v374 = vld [vmem:[%s335 + $0x120] sm:$0xff]
        %v375 = vld [vmem:[%s335 + $0x128] sm:$0xff]
        %v376 = vld [vmem:[%s335 + $0x130] sm:$0xff]
        %v377 = vld [vmem:[%s335 + $0x138] sm:$0xff]
        %v378 = vld [vmem:[%s335 + $0x140] sm:$0xff]
        %v379 = vld [vmem:[%s335 + $0x148] sm:$0xff]
        %v380 = vld [vmem:[%s335 + $0x150] sm:$0xff]
        %v381 = vld [vmem:[%s335 + $0x158] sm:$0xff]
        %v382 = vld [vmem:[%s335 + $0x160] sm:$0xff]
        %v383 = vld [vmem:[%s335 + $0x168] sm:$0xff]
        %v384 = vld [vmem:[%s335 + $0x170] sm:$0xff]
        %v385 = vld [vmem:[%s335 + $0x178] sm:$0xff]
        %v386 = vpack.c.bf16 %v341, %v338
        %v387 = vpack.c.bf16 %v342, %v339
        %v388 = vpack.c.bf16 %v343, %v340
        %v389 = vpack.c.bf16 %v347, %v344
        %v390 = vpack.c.bf16 %v348, %v345
        %v391 = vpack.c.bf16 %v349, %v346
        %v392 = vpack.c.bf16 %v353, %v350
        %v393 = vpack.c.bf16 %v354, %v351
        %v394 = vpack.c.bf16 %v355, %v352
        %v395 = vpack.c.bf16 %v359, %v356
        %v396 = vpack.c.bf16 %v360, %v357
        %v397 = vpack.c.bf16 %v361, %v358
        %v398 = vpack.c.bf16 %v365, %v362
        %v399 = vpack.c.bf16 %v366, %v363
        %v400 = vpack.c.bf16 %v367, %v364
        %v401 = vpack.c.bf16 %v371, %v368
        %v402 = vpack.c.bf16 %v372, %v369
        %v403 = vpack.c.bf16 %v373, %v370
        %v404 = vpack.c.bf16 %v377, %v374
        %v405 = vpack.c.bf16 %v378, %v375
        %v406 = vpack.c.bf16 %v379, %v376
        %v407 = vpack.c.bf16 %v383, %v380
        %v408 = vpack.c.bf16 %v384, %v381
        %v409 = vpack.c.bf16 %v385, %v382
        %v410 = vld [vmem:[%s1] sm:$0xff]
        %v411 = vld [vmem:[%s1 + $0x8] sm:$0xf]
        %v412 = vld [vmem:[%s1 + $0xc] sm:$0xff]
        %v413 = vld [vmem:[%s1 + $0x14] sm:$0xf]
        %v414 = vld [vmem:[%s1 + $0x18] sm:$0xff]
        %v415 = vld [vmem:[%s1 + $0x20] sm:$0xf]
        %v416 = vld [vmem:[%s1 + $0x24] sm:$0xff]
        %v417 = vld [vmem:[%s1 + $0x2c] sm:$0xf]
        %v418 = vld [vmem:[%s1 + $0x30] sm:$0xff]
        %v419 = vld [vmem:[%s1 + $0x38] sm:$0xf]
        %v420 = vld [vmem:[%s1 + $0x3c] sm:$0xff]
        %v421 = vld [vmem:[%s1 + $0x44] sm:$0xf]
        %v422 = vld [vmem:[%s1 + $0x48] sm:$0xff]
        %v423 = vld [vmem:[%s1 + $0x50] sm:$0xf]
        %v424 = vld [vmem:[%s1 + $0x54] sm:$0xff]
        %v425 = vld [vmem:[%s1 + $0x5c] sm:$0xf]
        %v426 = vld [vmem:[%s2] sm:$0xff]
        %v427 = vld [vmem:[%s2 + $0x8] sm:$0xff]
        %v428 = vld [vmem:[%s2 + $0x10] sm:$0xff]
        %v429 = vld [vmem:[%s2 + $0x18] sm:$0xff]
        %v430 = vld [vmem:[%s2 + $0x20] sm:$0xff]
        %v431 = vld [vmem:[%s2 + $0x28] sm:$0xff]
        %v432 = vld [vmem:[%s2 + $0x30] sm:$0xff]
        %v433 = vld [vmem:[%s2 + $0x38] sm:$0xff]
        %435 = vset.pattern.permute.xlu0 0
        %436 = vperm.xlu0 %435, %v426
        %v437 = vpop.permute.xlu0 %436
        %440 = vset.pattern.permute.xlu0 0
        %441 = vperm.xlu0 %440, %v427
        %v442 = vpop.permute.xlu0 %441
        %445 = vset.pattern.permute.xlu0 0
        %446 = vperm.xlu0 %445, %v428
        %v447 = vpop.permute.xlu0 %446
        %450 = vset.pattern.permute.xlu0 0
        %451 = vperm.xlu0 %450, %v429
        %v452 = vpop.permute.xlu0 %451
        %455 = vset.pattern.permute.xlu0 0
        %456 = vperm.xlu0 %455, %v430
        %v457 = vpop.permute.xlu0 %456
        %460 = vset.pattern.permute.xlu0 0
        %461 = vperm.xlu0 %460, %v431
        %v462 = vpop.permute.xlu0 %461
        %465 = vset.pattern.permute.xlu0 0
        %466 = vperm.xlu0 %465, %v432
        %v467 = vpop.permute.xlu0 %466
        %470 = vset.pattern.permute.xlu0 0
        %471 = vperm.xlu0 %470, %v433
        %v472 = vpop.permute.xlu0 %471
        %v490 = vunpack.c.l.b16 %v410
        %v491 = vunpack.c.h.b16 %v410
        %v492 = vunpack.c.l.b16 %v411
        %v493 = vunpack.c.l.b16 %v412
        %v494 = vunpack.c.h.b16 %v412
        %v495 = vunpack.c.l.b16 %v413
        %v496 = vunpack.c.l.b16 %v414
        %v497 = vunpack.c.h.b16 %v414
        %v498 = vunpack.c.l.b16 %v415
        %v499 = vunpack.c.l.b16 %v416
        %v500 = vunpack.c.h.b16 %v416
        %v501 = vunpack.c.l.b16 %v417
        %v502 = vunpack.c.l.b16 %v418
        %v503 = vunpack.c.h.b16 %v418
        %v504 = vunpack.c.l.b16 %v419
        %v505 = vunpack.c.l.b16 %v420
        %v506 = vunpack.c.h.b16 %v420
        %v507 = vunpack.c.l.b16 %v421
        %v508 = vunpack.c.l.b16 %v422
        %v509 = vunpack.c.h.b16 %v422
        %v510 = vunpack.c.l.b16 %v423
        %v511 = vunpack.c.l.b16 %v424
        %v512 = vunpack.c.h.b16 %v424
        %v513 = vunpack.c.l.b16 %v425
        %v514 = vpack.c.b16 %v493, %v490
        %v515 = vpack.c.b16 %v494, %v491
        %v516 = vpack.c.b16 %v495, %v492
        %v517 = vpack.c.b16 %v499, %v496
        %v518 = vpack.c.b16 %v500, %v497
        %v519 = vpack.c.b16 %v501, %v498
        %v520 = vpack.c.b16 %v505, %v502
        %v521 = vpack.c.b16 %v506, %v503
        %v522 = vpack.c.b16 %v507, %v504
        %v523 = vpack.c.b16 %v511, %v508
        %v524 = vpack.c.b16 %v512, %v509
        %v525 = vpack.c.b16 %v513, %v510
        %vm534 = vcmask 539648
        %v536 = vsel %vm534, %v516, 0
        %v539 = vsel %vm534, %v519, 0
        %v542 = vsel %vm534, %v522, 0
        %v545 = vsel %vm534, %v525, 0
        %v548 = vsel %vm534, %v388, 0
        %v551 = vsel %vm534, %v391, 0
        %v554 = vsel %vm534, %v394, 0
        %v557 = vsel %vm534, %v397, 0
        %v560 = vsel %vm534, %v400, 0
        %v563 = vsel %vm534, %v403, 0
        %v566 = vsel %vm534, %v406, 0
        %v569 = vsel %vm534, %v409, 0
        %571 = vmatprep.subr.bf16.mxu0 %v387
        %572 = vmatpush1.bf16.xpose.msra.mxu0 %v386
        %573 = vmatprep.subr.bf16.mxu0 %v390
        %574 = vmatpush1.bf16.xpose.msra.mxu0 %v389
        %575 = vmatprep.subr.bf16.mxu0 %v393
        %576 = vmatpush1.bf16.xpose.msra.mxu0 %v392
        %577 = vmatprep.subr.bf16.mxu0 %v396
        %578 = vmatpush1.bf16.xpose.msra.mxu0 %v395
        %579 = vmatprep.subr.bf16.mxu0 %v399
        %580 = vmatpush1.bf16.xpose.msra.mxu0 %v398
        %581 = vmatprep.subr.bf16.mxu0 %v402
        %582 = vmatpush1.bf16.xpose.msra.mxu0 %v401
        %583 = vmatprep.subr.bf16.mxu0 %v405
        %584 = vmatpush1.bf16.xpose.msra.mxu0 %v404
        %585 = vmatprep.subr.bf16.mxu0 %v408
        %586 = vmatpush1.bf16.xpose.msra.mxu0 %v407
        %587 = vmatprep.subr.bf16.mxu0 0
        %588 = vmatpush1.bf16.xpose.msra.mxu0 0
        %589 = vmatprep.subr.bf16.mxu0 0
        %590 = vmatpush1.bf16.xpose.msra.mxu0 0
        %591 = vmatprep.subr.bf16.mxu0 0
        %592 = vmatpush1.bf16.xpose.msra.mxu0 0
        %593 = vmatprep.subr.bf16.mxu0 0
        %594 = vmatpush1.bf16.xpose.msra.mxu0 0
        %595 = vmatprep.subr.bf16.mxu0 0
        %596 = vmatpush1.bf16.xpose.msra.mxu0 0
        %597 = vmatprep.subr.bf16.mxu0 0
        %598 = vmatpush1.bf16.xpose.msra.mxu0 0
        %599 = vmatprep.subr.bf16.mxu0 0
        %600 = vmatpush1.bf16.xpose.msra.mxu0 0
        %601 = vmatprep.subr.bf16.mxu0 0
        %602 = vmatpush1.bf16.xpose.msra.mxu0 0
        %603 = vmatprep.mubr.bf16.mxu0 %v515
        %604 = vmatmul.mubr.bf16.gmra.mrb[0].mxu0 %v514
        %v605 = vpop.f32.mrb[0].mxu0
        %v606 = vadd.f32 %v437, %v605
        %v607 = vpop.f32.mrb[0].mxu0
        %v608 = vpop.f32.mrb[0].mxu0
        %v609 = vadd.f32 %v442, %v608
        %v610 = vpop.f32.mrb[0].mxu0
        %611 = vmatprep.mubr.bf16.mxu0 %v518
        %612 = vmatmul.mubr.bf16.gmra.mrb[0].mxu0 %v517
        %v613 = vpop.f32.mrb[0].mxu0
        %v614 = vadd.f32 %v447, %v613
        %v615 = vpop.f32.mrb[0].mxu0
        %v616 = vpop.f32.mrb[0].mxu0
        %v617 = vadd.f32 %v452, %v616
        %v618 = vpop.f32.mrb[0].mxu0
        %619 = vmatprep.mubr.bf16.mxu0 %v521
        %620 = vmatmul.mubr.bf16.gmra.mrb[0].mxu0 %v520
        %v621 = vpop.f32.mrb[0].mxu0
        %v622 = vadd.f32 %v457, %v621
        %v623 = vpop.f32.mrb[0].mxu0
        %v624 = vpop.f32.mrb[0].mxu0
        %v625 = vadd.f32 %v462, %v624
        %v626 = vpop.f32.mrb[0].mxu0
        %627 = vmatprep.mubr.bf16.mxu0 %v524
        %628 = vmatmul.mubr.bf16.gmra.mrb[0].mxu0 %v523
        %v629 = vpop.f32.mrb[0].mxu0
        %v630 = vadd.f32 %v467, %v629
        %v631 = vpop.f32.mrb[0].mxu0
        %v632 = vpop.f32.mrb[0].mxu0
        %v633 = vadd.f32 %v472, %v632
        %v634 = vpop.f32.mrb[0].mxu0
        %635 = vdwg.mxu0
        %636 = vmatprep.subr.bf16.mxu0 0
        %637 = vmatpush1.bf16.xpose.msra.mxu0 %v548
        %638 = vmatprep.subr.bf16.mxu0 0
        %639 = vmatpush1.bf16.xpose.msra.mxu0 %v551
        %640 = vmatprep.subr.bf16.mxu0 0
        %641 = vmatpush1.bf16.xpose.msra.mxu0 %v554
        %642 = vmatprep.subr.bf16.mxu0 0
        %643 = vmatpush1.bf16.xpose.msra.mxu0 %v557
        %644 = vmatprep.subr.bf16.mxu0 0
        %645 = vmatpush1.bf16.xpose.msra.mxu0 %v560
        %646 = vmatprep.subr.bf16.mxu0 0
        %647 = vmatpush1.bf16.xpose.msra.mxu0 %v563
        %648 = vmatprep.subr.bf16.mxu0 0
        %649 = vmatpush1.bf16.xpose.msra.mxu0 %v566
        %650 = vmatprep.subr.bf16.mxu0 0
        %651 = vmatpush1.bf16.xpose.msra.mxu0 %v569
        %652 = vmatprep.subr.bf16.mxu0 0
        %653 = vmatpush1.bf16.xpose.msra.mxu0 0
        %654 = vmatprep.subr.bf16.mxu0 0
        %655 = vmatpush1.bf16.xpose.msra.mxu0 0
        %656 = vmatprep.subr.bf16.mxu0 0
        %657 = vmatpush1.bf16.xpose.msra.mxu0 0
        %658 = vmatprep.subr.bf16.mxu0 0
        %659 = vmatpush1.bf16.xpose.msra.mxu0 0
        %660 = vmatprep.subr.bf16.mxu0 0
        %661 = vmatpush1.bf16.xpose.msra.mxu0 0
        %662 = vmatprep.subr.bf16.mxu0 0
        %663 = vmatpush1.bf16.xpose.msra.mxu0 0
        %664 = vmatprep.subr.bf16.mxu0 0
        %665 = vmatpush1.bf16.xpose.msra.mxu0 0
        %666 = vmatprep.subr.bf16.mxu0 0
        %667 = vmatpush1.bf16.xpose.msra.mxu0 0
        %668 = vmatprep.mubr.bf16.mxu0 0
        %669 = vmatmul.mubr.bf16.gmra.mrb[0].mxu0 %v536
        %v670 = vpop.f32.mrb[0].mxu0
        %v671 = vadd.f32 %v606, %v670
        %v672 = vpop.f32.mrb[0].mxu0
        %v673 = vpop.f32.mrb[0].mxu0
        %v674 = vadd.f32 %v609, %v673
        %v675 = vpop.f32.mrb[0].mxu0
        %676 = vmatprep.mubr.bf16.mxu0 0
        %677 = vmatmul.mubr.bf16.gmra.mrb[0].mxu0 %v539
        %v678 = vpop.f32.mrb[0].mxu0
        %v679 = vadd.f32 %v614, %v678
        %v680 = vpop.f32.mrb[0].mxu0
        %v681 = vpop.f32.mrb[0].mxu0
        %v682 = vadd.f32 %v617, %v681
        %v683 = vpop.f32.mrb[0].mxu0
        %684 = vmatprep.mubr.bf16.mxu0 0
        %685 = vmatmul.mubr.bf16.gmra.mrb[0].mxu0 %v542
        %v686 = vpop.f32.mrb[0].mxu0
        %v687 = vadd.f32 %v622, %v686
        %v688 = vpop.f32.mrb[0].mxu0
        %v689 = vpop.f32.mrb[0].mxu0
        %v690 = vadd.f32 %v625, %v689
        %v691 = vpop.f32.mrb[0].mxu0
        %692 = vmatprep.mubr.bf16.mxu0 0
        %693 = vmatmul.mubr.bf16.gmra.mrb[0].mxu0 %v545
        %v694 = vpop.f32.mrb[0].mxu0
        %v695 = vadd.f32 %v630, %v694
        %v696 = vpop.f32.mrb[0].mxu0
        %v697 = vpop.f32.mrb[0].mxu0
        %v698 = vadd.f32 %v633, %v697
        %v699 = vpop.f32.mrb[0].mxu0
        %700 = vdwg.mxu0
        %v701 = vmax.f32 %v671, 0.0
        %v702 = vmax.f32 %v674, 0.0
        %v703 = vmax.f32 %v679, 0.0
        %v704 = vmax.f32 %v682, 0.0
        %v705 = vmax.f32 %v687, 0.0
        %v706 = vmax.f32 %v690, 0.0
        %v707 = vmax.f32 %v695, 0.0
        %v708 = vmax.f32 %v698, 0.0
        %v709 = vld [vmem:[%s3] sm:$0xf]
        %v710 = vld [vmem:[%s3 + $0x4] sm:$0xf]
        %v711 = vld [vmem:[%s3 + $0x8] sm:$0xf]
        %v712 = vld [vmem:[%s3 + $0xc] sm:$0xf]
        %v713 = vld [vmem:[%s3 + $0x10] sm:$0xf]
        %v714 = vld [vmem:[%s3 + $0x14] sm:$0xf]
        %v715 = vld [vmem:[%s3 + $0x18] sm:$0xf]
        %v716 = vld [vmem:[%s3 + $0x1c] sm:$0xf]
        %v717 = vpack.c.bf16 %v702, %v701
        %v718 = vpack.c.bf16 %v704, %v703
        %v719 = vpack.c.bf16 %v706, %v705
        %v720 = vpack.c.bf16 %v708, %v707
        %v721 = vld [vmem:[%s4] sm:$0xff]
        %v722 = vld [vmem:[%s4 + $0x8] sm:$0xff]
        %v723 = vld [vmem:[%s4 + $0x10] sm:$0xff]
        %v724 = vld [vmem:[%s4 + $0x18] sm:$0xff]
        %v725 = vld [vmem:[%s4 + $0x20] sm:$0xff]
        %v726 = vld [vmem:[%s4 + $0x28] sm:$0xff]
        %v727 = vld [vmem:[%s4 + $0x30] sm:$0xff]
        %v728 = vld [vmem:[%s4 + $0x38] sm:$0xff]
        %730 = vset.pattern.permute.xlu0 0
        %731 = vperm.xlu0 %730, %v721
        %v732 = vpop.permute.xlu0 %731
        %735 = vset.pattern.permute.xlu0 0
        %736 = vperm.xlu0 %735, %v722
        %v737 = vpop.permute.xlu0 %736
        %740 = vset.pattern.permute.xlu0 0
        %741 = vperm.xlu0 %740, %v723
        %v742 = vpop.permute.xlu0 %741
        %745 = vset.pattern.permute.xlu0 0
        %746 = vperm.xlu0 %745, %v724
        %v747 = vpop.permute.xlu0 %746
        %750 = vset.pattern.permute.xlu0 0
        %751 = vperm.xlu0 %750, %v725
        %v752 = vpop.permute.xlu0 %751
        %755 = vset.pattern.permute.xlu0 0
        %756 = vperm.xlu0 %755, %v726
        %v757 = vpop.permute.xlu0 %756
        %760 = vset.pattern.permute.xlu0 0
        %761 = vperm.xlu0 %760, %v727
        %v762 = vpop.permute.xlu0 %761
        %765 = vset.pattern.permute.xlu0 0
        %766 = vperm.xlu0 %765, %v728
        %v767 = vpop.permute.xlu0 %766
        %v777 = vunpack.c.l.b16 %v709
        %v778 = vunpack.c.l.b16 %v710
        %v779 = vunpack.c.l.b16 %v711
        %v780 = vunpack.c.l.b16 %v712
        %v781 = vunpack.c.l.b16 %v713
        %v782 = vunpack.c.l.b16 %v714
        %v783 = vunpack.c.l.b16 %v715
        %v784 = vunpack.c.l.b16 %v716
        %v785 = vpack.c.b16 %v778, %v777
        %v786 = vpack.c.b16 %v780, %v779
        %v787 = vpack.c.b16 %v782, %v781
        %v788 = vpack.c.b16 %v784, %v783
        %vm789 = vcmask 523264
        %v791 = vsel %vm789, %v785, 0
        %v794 = vsel %vm789, %v786, 0
        %v797 = vsel %vm789, %v787, 0
        %v800 = vsel %vm789, %v788, 0
        %802 = vmatprep.subr.bf16.mxu0 0
        %803 = vmatpush1.bf16.msra.mxu0 %v717
        %804 = vmatprep.subr.bf16.mxu0 0
        %805 = vmatpush1.bf16.msra.mxu0 %v718
        %806 = vmatprep.subr.bf16.mxu0 0
        %807 = vmatpush1.bf16.msra.mxu0 %v719
        %808 = vmatprep.subr.bf16.mxu0 0
        %809 = vmatpush1.bf16.msra.mxu0 %v720
        %810 = vmatprep.subr.bf16.mxu0 0
        %811 = vmatpush1.bf16.msra.mxu0 0
        %812 = vmatprep.subr.bf16.mxu0 0
        %813 = vmatpush1.bf16.msra.mxu0 0
        %814 = vmatprep.subr.bf16.mxu0 0
        %815 = vmatpush1.bf16.msra.mxu0 0
        %816 = vmatprep.subr.bf16.mxu0 0
        %817 = vmatpush1.bf16.msra.mxu0 0
        %818 = vmatprep.subr.bf16.mxu0 0
        %819 = vmatpush1.bf16.msra.mxu0 0
        %820 = vmatprep.subr.bf16.mxu0 0
        %821 = vmatpush1.bf16.msra.mxu0 0
        %822 = vmatprep.subr.bf16.mxu0 0
        %823 = vmatpush1.bf16.msra.mxu0 0
        %824 = vmatprep.subr.bf16.mxu0 0
        %825 = vmatpush1.bf16.msra.mxu0 0
        %826 = vmatprep.subr.bf16.mxu0 0
        %827 = vmatpush1.bf16.msra.mxu0 0
        %828 = vmatprep.subr.bf16.mxu0 0
        %829 = vmatpush1.bf16.msra.mxu0 0
        %830 = vmatprep.subr.bf16.mxu0 0
        %831 = vmatpush1.bf16.msra.mxu0 0
        %832 = vmatprep.subr.bf16.mxu0 0
        %833 = vmatpush1.bf16.msra.mxu0 0
        %834 = vmatprep.mubr.bf16.mxu0 0
        %835 = vmatmul.mubr.bf16.gmra.mrb[0].mxu0 %v791
        %v836 = vpop.f32.mrb[0].mxu0
        %v837 = vadd.f32 %v732, %v836
        %v838 = vpop.f32.mrb[0].mxu0
        %v839 = vpop.f32.mrb[0].mxu0
        %v840 = vadd.f32 %v737, %v839
        %v841 = vpop.f32.mrb[0].mxu0
        %842 = vmatprep.mubr.bf16.mxu0 0
        %843 = vmatmul.mubr.bf16.gmra.mrb[0].mxu0 %v794
        %v844 = vpop.f32.mrb[0].mxu0
        %v845 = vadd.f32 %v742, %v844
        %v846 = vpop.f32.mrb[0].mxu0
        %v847 = vpop.f32.mrb[0].mxu0
        %v848 = vadd.f32 %v747, %v847
        %v849 = vpop.f32.mrb[0].mxu0
        %850 = vmatprep.mubr.bf16.mxu0 0
        %851 = vmatmul.mubr.bf16.gmra.mrb[0].mxu0 %v797
        %v852 = vpop.f32.mrb[0].mxu0
        %v853 = vadd.f32 %v752, %v852
        %v854 = vpop.f32.mrb[0].mxu0
        %v855 = vpop.f32.mrb[0].mxu0
        %v856 = vadd.f32 %v757, %v855
        %v857 = vpop.f32.mrb[0].mxu0
        %858 = vmatprep.mubr.bf16.mxu0 0
        %859 = vmatmul.mubr.bf16.gmra.mrb[0].mxu0 %v800
        %v860 = vpop.f32.mrb[0].mxu0
        %v861 = vadd.f32 %v762, %v860
        %v862 = vpop.f32.mrb[0].mxu0
        %v863 = vpop.f32.mrb[0].mxu0
        %v864 = vadd.f32 %v767, %v863
        %v865 = vpop.f32.mrb[0].mxu0
        %866 = vdwg.mxu0
        %v867 = vmax.f32 %v837, 0.0
        %v868 = vmax.f32 %v840, 0.0
        %v869 = vmax.f32 %v845, 0.0
        %v870 = vmax.f32 %v848, 0.0
        %v871 = vmax.f32 %v853, 0.0
        %v872 = vmax.f32 %v856, 0.0
        %v873 = vmax.f32 %v861, 0.0
        %v874 = vmax.f32 %v864, 0.0
        %v875 = vld [vmem:[%s5] sm:$0xf]
        %v876 = vld [vmem:[%s5 + $0x4] sm:$0xf]
        %v877 = vld [vmem:[%s5 + $0x8] sm:$0xf]
        %v878 = vld [vmem:[%s5 + $0xc] sm:$0xf]
        %v879 = vpack.c.bf16 %v868, %v867
        %v880 = vpack.c.bf16 %v870, %v869
        %v881 = vpack.c.bf16 %v872, %v871
        %v882 = vpack.c.bf16 %v874, %v873
        %v883 = vld [vmem:[%s6] sm:$0xff]
        %v884 = vld [vmem:[%s6 + $0x8] sm:$0xff]
        %v885 = vld [vmem:[%s6 + $0x10] sm:$0xff]
        %v886 = vld [vmem:[%s6 + $0x18] sm:$0xff]
        %888 = vset.pattern.permute.xlu0 0
        %889 = vperm.xlu0 %888, %v883
        %v890 = vpop.permute.xlu0 %889
        %893 = vset.pattern.permute.xlu0 0
        %894 = vperm.xlu0 %893, %v884
        %v895 = vpop.permute.xlu0 %894
        %898 = vset.pattern.permute.xlu0 0
        %899 = vperm.xlu0 %898, %v885
        %v900 = vpop.permute.xlu0 %899
        %903 = vset.pattern.permute.xlu0 0
        %904 = vperm.xlu0 %903, %v886
        %v905 = vpop.permute.xlu0 %904
        %v911 = vunpack.c.l.b16 %v875
        %v912 = vunpack.c.l.b16 %v876
        %v913 = vunpack.c.l.b16 %v877
        %v914 = vunpack.c.l.b16 %v878
        %v915 = vpack.c.b16 %v912, %v911
        %v916 = vpack.c.b16 %v914, %v913
        %v918 = vsel %vm789, %v915, 0
        %v921 = vsel %vm789, %v916, 0
        %923 = vmatprep.subr.bf16.mxu0 0
        %924 = vmatpush1.bf16.msra.mxu0 %v879
        %925 = vmatprep.subr.bf16.mxu0 0
        %926 = vmatpush1.bf16.msra.mxu0 %v880
        %927 = vmatprep.subr.bf16.mxu0 0
        %928 = vmatpush1.bf16.msra.mxu0 %v881
        %929 = vmatprep.subr.bf16.mxu0 0
        %930 = vmatpush1.bf16.msra.mxu0 %v882
        %931 = vmatprep.subr.bf16.mxu0 0
        %932 = vmatpush1.bf16.msra.mxu0 0
        %933 = vmatprep.subr.bf16.mxu0 0
        %934 = vmatpush1.bf16.msra.mxu0 0
        %935 = vmatprep.subr.bf16.mxu0 0
        %936 = vmatpush1.bf16.msra.mxu0 0
        %937 = vmatprep.subr.bf16.mxu0 0
        %938 = vmatpush1.bf16.msra.mxu0 0
        %939 = vmatprep.subr.bf16.mxu0 0
        %940 = vmatpush1.bf16.msra.mxu0 0
        %941 = vmatprep.subr.bf16.mxu0 0
        %942 = vmatpush1.bf16.msra.mxu0 0
        %943 = vmatprep.subr.bf16.mxu0 0
        %944 = vmatpush1.bf16.msra.mxu0 0
        %945 = vmatprep.subr.bf16.mxu0 0
        %946 = vmatpush1.bf16.msra.mxu0 0
        %947 = vmatprep.subr.bf16.mxu0 0
        %948 = vmatpush1.bf16.msra.mxu0 0
        %949 = vmatprep.subr.bf16.mxu0 0
        %950 = vmatpush1.bf16.msra.mxu0 0
        %951 = vmatprep.subr.bf16.mxu0 0
        %952 = vmatpush1.bf16.msra.mxu0 0
        %953 = vmatprep.subr.bf16.mxu0 0
        %954 = vmatpush1.bf16.msra.mxu0 0
        %955 = vmatprep.mubr.bf16.mxu0 0
        %956 = vmatmul.mubr.bf16.gmra.mrb[0].mxu0 %v918
        %v957 = vpop.f32.mrb[0].mxu0
        %v958 = vadd.f32 %v890, %v957
        %v959 = vpop.f32.mrb[0].mxu0
        %v960 = vpop.f32.mrb[0].mxu0
        %v961 = vadd.f32 %v895, %v960
        %v962 = vpop.f32.mrb[0].mxu0
        %963 = vmatprep.mubr.bf16.mxu0 0
        %964 = vmatmul.mubr.bf16.gmra.mrb[0].mxu0 %v921
        %v965 = vpop.f32.mrb[0].mxu0
        %v966 = vadd.f32 %v900, %v965
        %v967 = vpop.f32.mrb[0].mxu0
        %v968 = vpop.f32.mrb[0].mxu0
        %v969 = vadd.f32 %v905, %v968
        %v970 = vpop.f32.mrb[0].mxu0
        %971 = vdwg.mxu0
        %v972 = vmax.f32 %v958, 0.0
        %v973 = vmax.f32 %v961, 0.0
        %v974 = vmax.f32 %v966, 0.0
        %v975 = vmax.f32 %v969, 0.0
        %v976 = vld [vmem:[%s7] sm:$0x1]
        %v977 = vpack.c.bf16 %v973, %v972
        %v978 = vpack.c.bf16 %v975, %v974
        %v979 = vld [vmem:[#allocation2] sm:$0x1]
        %981 = vset.pattern.permute.xlu0 0
        %982 = vperm.xlu0 %981, %v979
        %v983 = vpop.permute.xlu0 %982
        %v985 = vlaneseq
        %v986 = vshrl.u32 %v985, 7
        %v987 = vsub.s32 0, %v986
        %v988 = vrot.slane %v983, %v987
        %vm989 = vcmask 261120
        %v991 = vsel %vm989, %v976, 0
        %993 = vmatprep.subr.bf16.mxu0 0
        %994 = vmatpush1.bf16.msra.mxu0 %v977
        %995 = vmatprep.subr.bf16.mxu0 0
        %996 = vmatpush1.bf16.msra.mxu0 %v978
        %997 = vmatprep.subr.bf16.mxu0 0
        %998 = vmatpush1.bf16.msra.mxu0 0
        %999 = vmatprep.subr.bf16.mxu0 0
        %1000 = vmatpush1.bf16.msra.mxu0 0
        %1001 = vmatprep.subr.bf16.mxu0 0
        %1002 = vmatpush1.bf16.msra.mxu0 0
        %1003 = vmatprep.subr.bf16.mxu0 0
        %1004 = vmatpush1.bf16.msra.mxu0 0
        %1005 = vmatprep.subr.bf16.mxu0 0
        %1006 = vmatpush1.bf16.msra.mxu0 0
        %1007 = vmatprep.subr.bf16.mxu0 0
        %1008 = vmatpush1.bf16.msra.mxu0 0
        %1009 = vmatprep.subr.bf16.mxu0 0
        %1010 = vmatpush1.bf16.msra.mxu0 0
        %1011 = vmatprep.subr.bf16.mxu0 0
        %1012 = vmatpush1.bf16.msra.mxu0 0
        %1013 = vmatprep.subr.bf16.mxu0 0
        %1014 = vmatpush1.bf16.msra.mxu0 0
        %1015 = vmatprep.subr.bf16.mxu0 0
        %1016 = vmatpush1.bf16.msra.mxu0 0
        %1017 = vmatprep.subr.bf16.mxu0 0
        %1018 = vmatpush1.bf16.msra.mxu0 0
        %1019 = vmatprep.subr.bf16.mxu0 0
        %1020 = vmatpush1.bf16.msra.mxu0 0
        %1021 = vmatprep.subr.bf16.mxu0 0
        %1022 = vmatpush1.bf16.msra.mxu0 0
        %1023 = vmatprep.subr.bf16.mxu0 0
        %1024 = vmatpush1.bf16.msra.mxu0 0
        %1025 = vmatprep.mubr.bf16.mxu0 0
        %1026 = vmatmul.mubr.bf16.gmra.mrb[0].mxu0 %v991
        %v1027 = vpop.f32.mrb[0].mxu0
        %v1028 = vadd.f32 %v988, %v1027
        %v1029 = vpop.f32.mrb[0].mxu0
        %v1030 = vpop.f32.mrb[0].mxu0
        %v1031 = vpop.f32.mrb[0].mxu0
        %1032 = vdwg.mxu0
        %1033 = vst [vmem:[%s329] sm:$0x1] %v1028
        %s1034 = sand.u32 %s227, 1
        %s1035 = scalar_lea.sflag [#allocation4], %s1034
        %s1036 = sand.u32 %s227, 1
        %s1037 = scalar_lea.vmem [#allocation3], %s1036
        // Predicated region
        $region57: #{mlp_forward.1} parent=55 // pred_check
          %p1038 = pneg %p237
        $region58: #{mlp_forward.1} parent=55 // pred_check_branch
          %1040 = sbr.rel (%p1038) target = $region60
        $region59: #{mlp_forward.1} parent=55 // pred_region
          %s1042 = ssub.s32 16, 16
          %1043 = vsyncadd %s1035, %s1042
          %s1044 = smul.addr %s25, 16
          %s1045 = scalar_lea.hbm %s9, %s1044
          %s1047 = sshll.u32 %s1037, 4
          %s1048 = int_to_ptr.vmem [resolvable:$true] %s1047
          %1050 = dma.vmem_to_hbm [thread:$0]  %s1048, 16, %s1045, %s1035
        $region60: #{mlp_forward.1} parent=55 // pred_fallthru
          _
      $region56: #{mlp_forward.1} parent=5 // pred_fallthru
        _
      %p1051 = scmp.le.s32.totalorder 2, %s20
      // Predicated region
      $region61: #{mlp_forward.1} parent=5 // pred_check
        %p1052 = pneg %p1051
      $region62: #{mlp_forward.1} parent=5 // pred_check_branch
        %1054 = sbr.rel (%p1052) target = $region64
      $region63: #{mlp_forward.1} parent=5 // pred_region
        %s1055 = ssub.s32 %s20, 2
        // Predicated region
        $region65: #{mlp_forward.1} parent=63 // pred_check
          %p1056 = pneg %p243
        $region66: #{mlp_forward.1} parent=63 // pred_check_branch
          %1058 = sbr.rel (%p1056) target = $region68
        $region67: #{mlp_forward.1} parent=63 // pred_region
          %s1059 = sand.u32 %s228, 1
          %s1060 = scalar_lea.sflag [#allocation4], %s1059
          %s1061 = sand.u32 %s228, 1
          %s1062 = scalar_lea.vmem [#allocation3], %s1061
          %1063 = dma.done %s1060, 16
        $region68: #{mlp_forward.1} parent=63 // pred_fallthru
          _
      $region64: #{mlp_forward.1} parent=5 // pred_fallthru
        _
    $region6: #{mlp_forward.1} parent=1 // loop_footer
      %s24 = sadd.s32 1, %s20
    $region7: #{mlp_forward.1} parent=1 // loop_footer_branch
      %19 = sbr.rel target = $region3
    $region8: #{mlp_forward.1} parent=1 // loop_exit
      _
    %1064 = vsyncpa [#allocation4], 1
    %s1065 = scalar_lea.sflag [#allocation4], 1
    %1066 = vsyncpa %s1065, 1

</llo_original>
